<compile_context>
chip_gen: v7x
topology: tpu7x:2x2x1
jax: 0.10.0
libtpu: 0.0.40
codegen_flags: <defaults>
</compile_context>

<pallas_src>
import numpy as np
import jax
import jax.numpy as jnp
from jax.experimental import pallas as pl
from jax.experimental.pallas import tpu as pltpu


def _round_up(v, m):
    return ((v + m - 1) // m) * m


def _vmem_capacity_bytes():
    """Per-TensorCore VMEM capacity, generation-aware with a safe fallback."""
    try:
        info = pltpu.get_tpu_info()
        cap = getattr(info, "vmem_capacity_bytes", None)
        if cap:
            return int(cap)
    except Exception:
        pass
    return 64 * 1024 * 1024  # conservative: v7x per-core VMEM


# ----------------------------------------------------------------------------
# Kernel factory: segment (weighted) mean as   out = ((x [* w]) @ P) * scale
#   x : (BC_pad, N_pad or tk) f32   batch*channel slab of flattened WRF field
#   w : (1, N_pad or tk)      f32   per-point row weight (weighted path only)
#   p : (tk, tn)              int8  {0,1} one-hot cluster assignment
#   s : (1, tn)               f32   per-cluster scale (1/count or 1/sum(1/d))
#   o : (BC_pad, tn)          f32   resident across the K (reduction) axis
# Grid = (M_pad//tn parallel, N_pad//tk arbitrary); reduction axis is last.
# ----------------------------------------------------------------------------
def _make_kernel(*, weighted, x_resident, tk):
    def kernel(*refs):
        if weighted:
            x_ref, w_ref, p_ref, s_ref, o_ref = refs
        else:
            x_ref, p_ref, s_ref, o_ref = refs
            w_ref = None

        k = pl.program_id(1)

        @pl.when(k == 0)
        def _():
            o_ref[...] = jnp.zeros_like(o_ref)

        if x_resident:
            # x / w live fully in VMEM; slice the current K window.
            off = pl.multiple_of(k * tk, 128)
            x = x_ref[:, pl.ds(off, tk)]
            w = w_ref[:, pl.ds(off, tk)] if weighted else None
        else:
            x = x_ref[...]
            w = w_ref[...] if weighted else None

        xw = x * w if weighted else x                      # VPU broadcast mul
        p = p_ref[...].astype(jnp.float32)                 # int8 {0,1} -> f32 (exact)
        o_ref[...] += jnp.dot(xw, p,                       # pure f32 MXU, f32 acc
                              preferred_element_type=jnp.float32)

        @pl.when(k == pl.num_programs(1) - 1)
        def _():
            o_ref[...] = o_ref[...] * s_ref[...]           # column-scale epilogue

    return kernel


# ----------------------------------------------------------------------------
# VMEM accounting + tile selection
# ----------------------------------------------------------------------------
def _vmem_usage(BC_pad, tk, tn, N_pad, weighted, x_resident):
    use = 2 * BC_pad * tn * 4          # output block (double-buffered)
    use += 2 * 8 * tn * 4              # col-scale block (sublane-padded)
    use += 2 * tk * tn * 1             # int8 P block (double-buffered)
    use += tk * tn * 4                 # in-kernel f32 upcast of P
    use += BC_pad * tk * 4             # x slice / load temporary
    if weighted:
        use += BC_pad * tk * 4         # xw product temporary
    if x_resident:
        use += 2 * BC_pad * N_pad * 4  # resident x slab (default dbl-buffered)
        if weighted:
            use += 2 * 8 * N_pad * 4   # resident weight row
    else:
        use += 2 * BC_pad * tk * 4     # streamed x block
        if weighted:
            use += 2 * 8 * tk * 4      # streamed weight block
    return use


def _choose_tiling(BC_pad, N, M, tn_pref, weighted, budget):
    N128 = _round_up(N, 128)

    # Lane-dense output tile; do not over-pad tiny M.
    tn = max(128, min(_round_up(tn_pref, 128), _round_up(M, 128)))
    M_pad = _round_up(M, tn)
    # v7x megacore: prefer a >=2-step parallel axis when M allows it.
    if M_pad // tn < 2 <= _round_up(M, 128) // 128:
        tn = 128
        M_pad = _round_up(M, 128)

    TK_CAP = 4096
    tk_start = min(TK_CAP, N128)
    choice = None
    for x_resident in (True, False):        # prefer the resident-x layout
        for tk in range(tk_start, 0, -128):
            N_pad = _round_up(N128, tk)
            # Keep padded-K streaming waste small.
            if tk > 128 and (N_pad - N128) / N128 > 0.03:
                continue
            if _vmem_usage(BC_pad, tk, tn, N_pad, weighted, x_resident) <= budget:
                choice = (tk, tn, N_pad, M_pad, x_resident)
                break
        if choice is not None:
            break
    if choice is None:  # pathological sizes: minimal tiles, streamed x
        choice = (128, tn, N128, M_pad, False)
    return choice


# ----------------------------------------------------------------------------
# pallas_call assembly
# ----------------------------------------------------------------------------
def _seg_mean_matmul(x2d, w_row, p_int8, col_scale, *, tk, tn, weighted,
                     x_resident, vmem_limit):
    BC_pad, N_pad = x2d.shape
    M_pad = p_int8.shape[1]
    assert N_pad % tk == 0 and M_pad % tn == 0 and BC_pad % 8 == 0
    grid = (M_pad // tn, N_pad // tk)

    if x_resident:
        x_spec = pl.BlockSpec((BC_pad, N_pad), lambda j, k: (0, 0))
        w_spec = pl.BlockSpec((1, N_pad), lambda j, k: (0, 0))
    else:
        x_spec = pl.BlockSpec((BC_pad, tk), lambda j, k: (0, k))
        w_spec = pl.BlockSpec((1, tk), lambda j, k: (0, k))
    p_spec = pl.BlockSpec((tk, tn), lambda j, k: (k, j))
    s_spec = pl.BlockSpec((1, tn), lambda j, k: (0, j))

    in_specs = [x_spec] + ([w_spec] if weighted else []) + [p_spec, s_spec]
    operands = [x2d] + ([w_row] if weighted else []) + [p_int8, col_scale]

    flops = 2 * BC_pad * N_pad * M_pad
    x_streams = 1 if x_resident else grid[0]     # x re-streamed per M tile if tiled
    bytes_accessed = (x_streams * BC_pad * N_pad * 4
                      + N_pad * M_pad * 1                     # int8 P
                      + (N_pad * 4 if weighted else 0)
                      + M_pad * 4
                      + BC_pad * M_pad * 4)

    kernel = _make_kernel(weighted=weighted, x_resident=x_resident, tk=tk)

    return pl.pallas_call(
        kernel,
        out_shape=jax.ShapeDtypeStruct((BC_pad, M_pad), jnp.float32),
        grid_spec=pltpu.PrefetchScalarGridSpec(
            num_scalar_prefetch=0,
            grid=grid,
            in_specs=in_specs,
            out_specs=pl.BlockSpec((BC_pad, tn), lambda j, k: (0, j)),
        ),
        compiler_params=pltpu.CompilerParams(
            dimension_semantics=("parallel", "arbitrary"),
            vmem_limit_bytes=vmem_limit,
        ),
        cost_estimate=pl.CostEstimate(
            flops=flops, transcendentals=0, bytes_accessed=bytes_accessed),
    )(*operands)


# ----------------------------------------------------------------------------
# Module setup (host-side glue): nearest-neighbour mapping + factored operands
# ----------------------------------------------------------------------------
def build_mapping_nearest(wrf_coords, era_coords):
    """mapping[n] = index of nearest era coord to wrf point n; also distances."""
    diff = wrf_coords[:, None, :] - era_coords[None, :, :]
    d2 = np.square(diff).sum(-1)
    mapping = np.argmin(d2, axis=-1)
    distances = np.sqrt(d2[np.arange(d2.shape[0]), mapping])
    return mapping, distances


def build_factored_aggregation(mapping, weighted=False, distances=None):
    """Return (P one-hot (N, M) int8, row_weight (N,) f32 or None,
    col_scale (M,) f32).

    Column order follows sorted unique cluster ids, matching the torch module's
    `mapping.unique(return_counts=True)` / stable-sort split semantics.  The
    reduction stays exact: P only holds 0/1; all non-trivial values live in the
    f32 row-weight and column-scale vectors.
    """
    mapping = np.asarray(mapping)
    N = mapping.shape[0]
    uniq, inv, counts = np.unique(mapping, return_inverse=True, return_counts=True)
    M = uniq.shape[0]
    P = np.zeros((N, M), dtype=np.int8)
    P[np.arange(N), inv] = 1
    if weighted:
        assert distances is not None
        rd = 1.0 / np.asarray(distances, dtype=np.float64)
        denom = np.zeros((M,), dtype=np.float64)
        np.add.at(denom, inv, rd)
        row_w = rd.astype(np.float32)
        col_scale = (1.0 / denom).astype(np.float32)
    else:
        row_w = None                                   # unweighted: no row stream
        col_scale = (1.0 / counts.astype(np.float64)).astype(np.float32)
    return P, row_w, col_scale


# ----------------------------------------------------------------------------
# Public wrapper: equivalent of MeanToERA5.forward / forward_weighted
# ----------------------------------------------------------------------------
def mean_to_era5(x, p_onehot, col_scale, row_weight=None, *, tn=256):
    """x: (..., H, W); p_onehot: (N=H*W, M) {0,1}; col_scale: (M,);
    row_weight: (N,) or None (unweighted)  ->  (..., M)."""
    *lead, H, W = x.shape
    N = H * W
    M = p_onehot.shape[1]
    assert p_onehot.shape[0] == N
    weighted = row_weight is not None
    BC = int(np.prod(lead)) if lead else 1

    BC_pad = _round_up(max(BC, 1), 8)          # f32 sublane packing

    # Generation-scaled VMEM budget (~54 MiB on v7x, ~108 MiB on v5e/v6e),
    # with headroom for Mosaic internal scratch and vregs.
    vmem_cap = _vmem_capacity_bytes()
    vmem_limit = min(int(vmem_cap * 0.85), vmem_cap - 8 * 1024 * 1024)
    budget = vmem_limit - 6 * 1024 * 1024

    tk, tn, N_pad, M_pad, x_resident = _choose_tiling(
        BC_pad, N, M, tn, weighted, budget)

    xf = jnp.asarray(x, jnp.float32).reshape(BC, N)
    xf = jnp.pad(xf, ((0, BC_pad - BC), (0, N_pad - N)))
    p = jnp.pad(jnp.asarray(p_onehot, jnp.int8),
                ((0, N_pad - N), (0, M_pad - M)))
    s = jnp.pad(jnp.asarray(col_scale, jnp.float32), (0, M_pad - M)).reshape(1, M_pad)
    w = None
    if weighted:
        w = jnp.pad(jnp.asarray(row_weight, jnp.float32),
                    (0, N_pad - N)).reshape(1, N_pad)

    out = _seg_mean_matmul(xf, w, p, s, tk=tk, tn=tn, weighted=weighted,
                           x_resident=x_resident, vmem_limit=vmem_limit)
    return out[:BC, :M].reshape(*lead, M)


# ----------------------------------------------------------------------------
# Demo / correctness check
# ----------------------------------------------------------------------------
if __name__ == "__main__":
    key = jax.random.PRNGKey(0)
    k1, k2, k3 = jax.random.split(key, 3)

    B, C, H, W = 2, 4, 16, 16      # NCHW input (WRF grid output)
    M_ERA = 64                     # number of ERA5 target points
    N = H * W

    # deterministic synthetic coordinates (stand-in for era/wrf lat-lon grids)
    era_coords = np.asarray(jax.random.uniform(k1, (M_ERA, 2)), dtype=np.float64)
    wrf_coords = np.asarray(jax.random.uniform(k2, (N, 2)), dtype=np.float64)

    # mapping_mode='nearest' (sklearn-KMeans assignment is host-side preprocessing)
    mapping, distances = build_mapping_nearest(wrf_coords, era_coords)

    # unweighted (weighted=False) and weighted (weighted=True) factored operands
    P_u, _, s_u = build_factored_aggregation(mapping, weighted=False)
    P_w, w_w, s_w = build_factored_aggregation(mapping, weighted=True,
                                               distances=distances)

    x = jax.random.normal(k3, (B, C, H, W), dtype=jnp.float32)

    out_unw = jax.block_until_ready(mean_to_era5(x, P_u, s_u))
    out_wt = jax.block_until_ready(mean_to_era5(x, P_w, s_w, row_weight=w_w))

    # pure-numpy reference (same split/mean semantics as the torch module)
    xf = np.asarray(x, dtype=np.float64).reshape(B * C, N)
    uniq = np.unique(mapping)
    ref_unw = np.stack(
        [xf[:, mapping == c].mean(-1) for c in uniq], axis=-1
    ).reshape(B, C, -1)
    rd = 1.0 / distances
    ref_wt = np.stack(
        [
            (xf[:, mapping == c] * rd[mapping == c]).sum(-1)
            / rd[mapping == c].sum()
            for c in uniq
        ],
        axis=-1,
    ).reshape(B, C, -1)

    assert out_unw.shape == (B, C, uniq.shape[0])
    assert out_wt.shape == (B, C, uniq.shape[0])
    np.testing.assert_allclose(np.asarray(out_unw), ref_unw, rtol=1e-4, atol=1e-5)
    np.testing.assert_allclose(np.asarray(out_wt), ref_wt, rtol=1e-4, atol=1e-5)

    print("KERNEL_OK")
</pallas_src>

<mosaic_0001>
module attributes {stable_mosaic.version = 11 : i64} {
  func.func @kernel(%arg0: i32, %arg1: i32, %arg2: memref<8x256xf32, #tpu.memory_space<vmem>>, %arg3: memref<256x128xi8, #tpu.memory_space<vmem>>, %arg4: memref<1x128xf32, #tpu.memory_space<vmem>>, %arg5: memref<8x128xf32, #tpu.memory_space<vmem>>) attributes {dimension_semantics = [#tpu.dimension_semantics<parallel>, #tpu.dimension_semantics<arbitrary>], iteration_bounds = array<i64: 1, 1>, scalar_prefetch = 0 : i64, scratch_operands = 0 : i64, tpu.core_type = #tpu.core_type<tc>, window_params = [{pipeline_mode = #tpu.pipeline_mode<synchronous>, transform_indices = @transform_0, window_bounds = array<i64: 8, 256>}, {transform_indices = @transform_1, window_bounds = array<i64: 256, 128>}, {transform_indices = @transform_2, window_bounds = array<i64: 1, 128>}, {transform_indices = @transform_3, window_bounds = array<i64: 8, 128>}]} {
    %c0_i32 = arith.constant 0 : i32
    %0 = arith.cmpi eq, %arg1, %c0_i32 : i32
    %1 = arith.extui %0 : i1 to i32
    %c0_i32_0 = arith.constant 0 : i32
    %2 = arith.cmpi ne, %1, %c0_i32_0 : i32
    scf.if %2 {
      %cst_9 = arith.constant 0.000000e+00 : f32
      %16 = vector.broadcast %cst_9 : f32 to vector<8x128xf32>
      %c0_10 = arith.constant 0 : index
      %c0_11 = arith.constant 0 : index
      %17 = vector.load %arg5[%c0_10, %c0_11] : memref<8x128xf32, #tpu.memory_space<vmem>>, vector<8x128xf32>
      tpu.vector_store %arg5[%c0_10, %c0_11], %16 {strides = array<i32>} : memref<8x128xf32, #tpu.memory_space<vmem>>, vector<8x128xf32>,
    } else {
    }
    %c256_i32 = arith.constant 256 : i32
    %3 = arith.muli %arg1, %c256_i32 : i32
    %4 = tpu.assume_multiple %3, 128 : i32
    %c0 = arith.constant 0 : index
    %5 = arith.index_cast %4 : i32 to index
    %6 = vector.load %arg2[%c0, %5] : memref<8x256xf32, #tpu.memory_space<vmem>>, vector<8x256xf32>
    %c0_1 = arith.constant 0 : index
    %c0_2 = arith.constant 0 : index
    %7 = vector.load %arg3[%c0_1, %c0_2] : memref<256x128xi8, #tpu.memory_space<vmem>>, vector<256x128xi8>
    %8 = arith.sitofp %7 : vector<256x128xi8> to vector<256x128xf32>
    %c0_3 = arith.constant 0 : index
    %c0_4 = arith.constant 0 : index
    %9 = vector.load %arg5[%c0_3, %c0_4] : memref<8x128xf32, #tpu.memory_space<vmem>>, vector<8x128xf32>
    %cst = arith.constant dense<0.000000e+00> : vector<8x128xf32>
    %10 = tpu.matmul %6, %8, %cst {dimension_numbers = #tpu.dot_dimension_numbers<[1], [0], [0], [1], [0, 0, 1, 1], [], []>} : vector<8x256xf32>, vector<256x128xf32>, vector<8x128xf32> -> vector<8x128xf32>
    %11 = arith.addf %9, %10 : vector<8x128xf32>
    %c0_5 = arith.constant 0 : index
    %c0_6 = arith.constant 0 : index
    %12 = vector.load %arg5[%c0_5, %c0_6] : memref<8x128xf32, #tpu.memory_space<vmem>>, vector<8x128xf32>
    tpu.vector_store %arg5[%c0_5, %c0_6], %11 {strides = array<i32>} : memref<8x128xf32, #tpu.memory_space<vmem>>, vector<8x128xf32>,
    %c0_i32_7 = arith.constant 0 : i32
    %13 = arith.cmpi eq, %arg1, %c0_i32_7 : i32
    %14 = arith.extui %13 : i1 to i32
    %c0_i32_8 = arith.constant 0 : i32
    %15 = arith.cmpi ne, %14, %c0_i32_8 : i32
    scf.if %15 {
      %c0_9 = arith.constant 0 : index
      %c0_10 = arith.constant 0 : index
      %16 = vector.load %arg5[%c0_9, %c0_10] : memref<8x128xf32, #tpu.memory_space<vmem>>, vector<8x128xf32>
      %c0_11 = arith.constant 0 : index
      %c0_12 = arith.constant 0 : index
      %17 = vector.load %arg4[%c0_11, %c0_12] : memref<1x128xf32, #tpu.memory_space<vmem>>, vector<1x128xf32>
      %18 = vector.broadcast %17 : vector<1x128xf32> to vector<8x128xf32>
      %19 = arith.mulf %16, %18 : vector<8x128xf32>
      %c0_13 = arith.constant 0 : index
      %c0_14 = arith.constant 0 : index
      %20 = vector.load %arg5[%c0_13, %c0_14] : memref<8x128xf32, #tpu.memory_space<vmem>>, vector<8x128xf32>
      tpu.vector_store %arg5[%c0_13, %c0_14], %19 {strides = array<i32>} : memref<8x128xf32, #tpu.memory_space<vmem>>, vector<8x128xf32>,
    } else {
    }
    return
  }
  func.func @transform_0(%arg0: i32, %arg1: i32) -> (i32, i32) {
    %c0_i32 = arith.constant 0 : i32
    %c0_i32_0 = arith.constant 0 : i32
    %c0_i32_1 = arith.constant 0 : i32
    return %c0_i32, %c0_i32_0 : i32, i32
  }
  func.func @transform_1(%arg0: i32, %arg1: i32) -> (i32, i32) {
    %c0_i32 = arith.constant 0 : i32
    return %arg1, %arg0 : i32, i32
  }
  func.func @transform_2(%arg0: i32, %arg1: i32) -> (i32, i32) {
    %c0_i32 = arith.constant 0 : i32
    %c0_i32_0 = arith.constant 0 : i32
    return %c0_i32, %arg0 : i32, i32
  }
  func.func @transform_3(%arg0: i32, %arg1: i32) -> (i32, i32) {
    %c0_i32 = arith.constant 0 : i32
    %c0_i32_0 = arith.constant 0 : i32
    return %c0_i32, %arg0 : i32, i32
  }
}

</mosaic_0001>

<llo_original>
// kernel: tpu_custom_call.1
$region0: #{tpu_custom_call.1}
  #allocation0 [shape = 'u32[]', space=smem, size = 0x4, offset = 0x4, fixed_abs, tag = 'smem constant byte address 0x4 - core index']
  #allocation1 [shape = 'u32[144,128]{1,0:T(1,128)}', space=vmem, size = 0x12000, scoped, tag = 'internal scratch']
  %s0 = inlined_call_operand.hbm [shape: f32[8,256], index: 0, kind: input, shape index: {}]
  %s1 = inlined_call_operand.hbm [shape: s8[256,128], index: 1, kind: input, shape index: {}]
  %s2 = inlined_call_operand.vmem [shape: f32[1,128], index: 2, kind: input, shape index: {}]
  %s3 = inlined_call_operand.hbm [shape: f32[8,128], index: 3, kind: output, shape index: {}]
  %s4 = sld [smem:[#allocation0]]
  $region38: #{tpu_custom_call.1} parent=0
    _
  %s6 = ssub.s32 1, %s4
  %s7 = scalar_select 0, %s6, %s4
  $region1: #{tpu_custom_call.1} parent=0
    #allocation2 [shape = 'u8[8192]{0}', space=vmem, size = 0x2000, scoped, tag = 'input window, operand 0, single buffered']
    #allocation3 [shape = 's32[1]{0}', space=sflag, size = 0x4, scoped, tag = 'scoped memory for tpu_custom_call.1']
    #allocation4 [shape = 's32[1]{0}', space=sflag, size = 0x4, scoped, tag = 'scoped memory for tpu_custom_call.1']
    #allocation5 [shape = 'u8[32768]{0}', space=vmem, size = 0x8000, scoped, tag = 'input window, operand 1, single buffered']
    #allocation6 [shape = 's32[1]{0}', space=sflag, size = 0x4, scoped, tag = 'scoped memory for tpu_custom_call.1']
    #allocation7 [shape = 'u8[4096]{0}', space=vmem, size = 0x1000, scoped, tag = 'output window, operand 0, single buffered']
    %8 = vsyncpa [#allocation3], 0
    %9 = vsyncpa [#allocation6], 0
    %10 = vsyncpa [#allocation4], 0
    // Predicated region
    $region2: #{tpu_custom_call.1} parent=1 // pred_check
      _
    $region3: #{tpu_custom_call.1} parent=1 // pred_check_branch
      %12 = sbr.rel (0) target = $region5
    $region4: #{tpu_custom_call.1} parent=1 // pred_region
      %s14 = ssub.s32 256, 256
      %15 = vsyncadd [#allocation3], %s14
      %s17 = sshll.u32 [#allocation2], 4
      %s18 = int_to_ptr.vmem [resolvable:$true] %s17
      %20 = dma.hbm_to_vmem [thread:$0]  %s0, 256, %s18, [#allocation3]
    $region5: #{tpu_custom_call.1} parent=1 // pred_fallthru
      _
    // Predicated region
    $region6: #{tpu_custom_call.1} parent=1 // pred_check
      _
    $region7: #{tpu_custom_call.1} parent=1 // pred_check_branch
      %22 = sbr.rel (0) target = $region9
    $region8: #{tpu_custom_call.1} parent=1 // pred_region
      %s24 = ssub.s32 1024, 1024
      %25 = vsyncadd [#allocation6], %s24
      %s26 = sshll.u32 [#allocation5], 4
      %s27 = int_to_ptr.vmem [resolvable:$true] %s26
      %32 = dma.hbm_to_vmem [thread:$0]  %s1, 1024, %s27, [#allocation6], 128, 128, 8
    $region9: #{tpu_custom_call.1} parent=1 // pred_fallthru
      _
    // Predicated region
    $region10: #{tpu_custom_call.1} parent=1 // pred_check
      _
    $region11: #{tpu_custom_call.1} parent=1 // pred_check_branch
      %34 = sbr.rel (0) target = $region13
    $region12: #{tpu_custom_call.1} parent=1 // pred_region
      _
    $region13: #{tpu_custom_call.1} parent=1 // pred_fallthru
      _
    // Predicated region
    $region14: #{tpu_custom_call.1} parent=1 // pred_check
      _
    $region15: #{tpu_custom_call.1} parent=1 // pred_check_branch
      %36 = sbr.rel (0) target = $region17
    $region16: #{tpu_custom_call.1} parent=1 // pred_region
      %37 = dma.done [#allocation3], 256
    $region17: #{tpu_custom_call.1} parent=1 // pred_fallthru
      _
    // Predicated region
    $region18: #{tpu_custom_call.1} parent=1 // pred_check
      _
    $region19: #{tpu_custom_call.1} parent=1 // pred_check_branch
      %39 = sbr.rel (0) target = $region21
    $region20: #{tpu_custom_call.1} parent=1 // pred_region
      %40 = dma.done [#allocation6], 1024
    $region21: #{tpu_custom_call.1} parent=1 // pred_fallthru
      _
    %p41 = scmp.eq.s32.totalorder 0, 0
    // Predicated region
    $region22: #{tpu_custom_call.1} parent=1 // pred_check
      %p42 = pneg %p41
    $region23: #{tpu_custom_call.1} parent=1 // pred_check_branch
      %44 = sbr.rel (%p42) target = $region25
    $region24: #{tpu_custom_call.1} parent=1 // pred_region
      %45 = vst [vmem:[#allocation7] sm:$0xff] 0.0
    $region25: #{tpu_custom_call.1} parent=1 // pred_fallthru
      _
    %s46 = smul.u32 0, 256
    %s47 = sshra.s32 %s46, 7
    %s48 = sand.u32 %s46, 127
    %s49 = smul.addr %s47, 8
    %s50 = scalar_lea.vmem [#allocation2], %s49
    %v51 = vld [vmem:[%s50] sm:$0xff]
    %v52 = vld [vmem:[%s50 + $0x8] sm:$0xff]
    %v53 = vld [vmem:[#allocation5] sm:$0xff]
    %v54 = vld [vmem:[#allocation5 + $0x8] sm:$0xff]
    %v55 = vld [vmem:[#allocation5 + $0x10] sm:$0xff]
    %v56 = vld [vmem:[#allocation5 + $0x18] sm:$0xff]
    %v57 = vld [vmem:[#allocation5 + $0x20] sm:$0xff]
    %v58 = vld [vmem:[#allocation5 + $0x28] sm:$0xff]
    %v59 = vld [vmem:[#allocation5 + $0x30] sm:$0xff]
    %v60 = vld [vmem:[#allocation5 + $0x38] sm:$0xff]
    %v61 = vunpack.c.0.s8 %v53
    %v62 = vunpack.c.1.s8 %v53
    %v63 = vunpack.c.2.s8 %v53
    %v64 = vunpack.c.3.s8 %v53
    %v65 = vunpack.c.0.s8 %v54
    %v66 = vunpack.c.1.s8 %v54
    %v67 = vunpack.c.2.s8 %v54
    %v68 = vunpack.c.3.s8 %v54
    %v69 = vunpack.c.0.s8 %v55
    %v70 = vunpack.c.1.s8 %v55
    %v71 = vunpack.c.2.s8 %v55
    %v72 = vunpack.c.3.s8 %v55
    %v73 = vunpack.c.0.s8 %v56
    %v74 = vunpack.c.1.s8 %v56
    %v75 = vunpack.c.2.s8 %v56
    %v76 = vunpack.c.3.s8 %v56
    %v77 = vunpack.c.0.s8 %v57
    %v78 = vunpack.c.1.s8 %v57
    %v79 = vunpack.c.2.s8 %v57
    %v80 = vunpack.c.3.s8 %v57
    %v81 = vunpack.c.0.s8 %v58
    %v82 = vunpack.c.1.s8 %v58
    %v83 = vunpack.c.2.s8 %v58
    %v84 = vunpack.c.3.s8 %v58
    %v85 = vunpack.c.0.s8 %v59
    %v86 = vunpack.c.1.s8 %v59
    %v87 = vunpack.c.2.s8 %v59
    %v88 = vunpack.c.3.s8 %v59
    %v89 = vunpack.c.0.s8 %v60
    %v90 = vunpack.c.1.s8 %v60
    %v91 = vunpack.c.2.s8 %v60
    %v92 = vunpack.c.3.s8 %v60
    %v93 = vcvt.s32.f32 %v61
    %v94 = vcvt.s32.f32 %v62
    %v95 = vcvt.s32.f32 %v63
    %v96 = vcvt.s32.f32 %v64
    %v97 = vcvt.s32.f32 %v65
    %v98 = vcvt.s32.f32 %v66
    %v99 = vcvt.s32.f32 %v67
    %v100 = vcvt.s32.f32 %v68
    %v101 = vcvt.s32.f32 %v69
    %v102 = vcvt.s32.f32 %v70
    %v103 = vcvt.s32.f32 %v71
    %v104 = vcvt.s32.f32 %v72
    %v105 = vcvt.s32.f32 %v73
    %v106 = vcvt.s32.f32 %v74
    %v107 = vcvt.s32.f32 %v75
    %v108 = vcvt.s32.f32 %v76
    %v109 = vcvt.s32.f32 %v77
    %v110 = vcvt.s32.f32 %v78
    %v111 = vcvt.s32.f32 %v79
    %v112 = vcvt.s32.f32 %v80
    %v113 = vcvt.s32.f32 %v81
    %v114 = vcvt.s32.f32 %v82
    %v115 = vcvt.s32.f32 %v83
    %v116 = vcvt.s32.f32 %v84
    %v117 = vcvt.s32.f32 %v85
    %v118 = vcvt.s32.f32 %v86
    %v119 = vcvt.s32.f32 %v87
    %v120 = vcvt.s32.f32 %v88
    %v121 = vcvt.s32.f32 %v89
    %v122 = vcvt.s32.f32 %v90
    %v123 = vcvt.s32.f32 %v91
    %v124 = vcvt.s32.f32 %v92
    %v125 = vld [vmem:[#allocation7] sm:$0xff]
    %126 = vmatprep.subr.mxu0 0.0
    %127 = vmatpush1.msra.mxu0 %v93
    %128 = vmatprep.subr.mxu0 0.0
    %129 = vmatpush1.msra.mxu0 %v94
    %130 = vmatprep.subr.mxu0 0.0
    %131 = vmatpush1.msra.mxu0 %v95
    %132 = vmatprep.subr.mxu0 0.0
    %133 = vmatpush1.msra.mxu0 %v96
    %134 = vmatprep.subr.mxu0 0.0
    %135 = vmatpush1.msra.mxu0 %v97
    %136 = vmatprep.subr.mxu0 0.0
    %137 = vmatpush1.msra.mxu0 %v98
    %138 = vmatprep.subr.mxu0 0.0
    %139 = vmatpush1.msra.mxu0 %v99
    %140 = vmatprep.subr.mxu0 0.0
    %141 = vmatpush1.msra.mxu0 %v100
    %142 = vmatprep.subr.mxu0 0.0
    %143 = vmatpush1.msra.mxu0 %v101
    %144 = vmatprep.subr.mxu0 0.0
    %145 = vmatpush1.msra.mxu0 %v102
    %146 = vmatprep.subr.mxu0 0.0
    %147 = vmatpush1.msra.mxu0 %v103
    %148 = vmatprep.subr.mxu0 0.0
    %149 = vmatpush1.msra.mxu0 %v104
    %150 = vmatprep.subr.mxu0 0.0
    %151 = vmatpush1.msra.mxu0 %v105
    %152 = vmatprep.subr.mxu0 0.0
    %153 = vmatpush1.msra.mxu0 %v106
    %154 = vmatprep.subr.mxu0 0.0
    %155 = vmatpush1.msra.mxu0 %v107
    %156 = vmatprep.subr.mxu0 0.0
    %157 = vmatpush1.msra.mxu0 %v108
    %158 = vmatprep.subr.mxu0 0.0
    %159 = vmatpush1.msra.mxu0 %v109
    %160 = vmatprep.subr.mxu0 0.0
    %161 = vmatpush1.msra.mxu0 %v110
    %162 = vmatprep.subr.mxu0 0.0
    %163 = vmatpush1.msra.mxu0 %v111
    %164 = vmatprep.subr.mxu0 0.0
    %165 = vmatpush1.msra.mxu0 %v112
    %166 = vmatprep.subr.mxu0 0.0
    %167 = vmatpush1.msra.mxu0 %v113
    %168 = vmatprep.subr.mxu0 0.0
    %169 = vmatpush1.msra.mxu0 %v114
    %170 = vmatprep.subr.mxu0 0.0
    %171 = vmatpush1.msra.mxu0 %v115
    %172 = vmatprep.subr.mxu0 0.0
    %173 = vmatpush1.msra.mxu0 %v116
    %174 = vmatprep.subr.mxu0 0.0
    %175 = vmatpush1.msra.mxu0 %v117
    %176 = vmatprep.subr.mxu0 0.0
    %177 = vmatpush1.msra.mxu0 %v118
    %178 = vmatprep.subr.mxu0 0.0
    %179 = vmatpush1.msra.mxu0 %v119
    %180 = vmatprep.subr.mxu0 0.0
    %181 = vmatpush1.msra.mxu0 %v120
    %182 = vmatprep.subr.mxu0 0.0
    %183 = vmatpush1.msra.mxu0 %v121
    %184 = vmatprep.subr.mxu0 0.0
    %185 = vmatpush1.msra.mxu0 %v122
    %186 = vmatprep.subr.mxu0 0.0
    %187 = vmatpush1.msra.mxu0 %v123
    %188 = vmatprep.subr.mxu0 0.0
    %189 = vmatpush1.msra.mxu0 %v124
    %190 = vmatprep.mubr.f32.mxu0 %v52
    %191 = vmatmul.mubr.f32.gmra.mrb[0].mxu0 %v51
    %v192 = vpop.f32.mrb[0].mxu0
    %v193 = vadd.f32 0.0, %v192
    %v194 = vpop.f32.mrb[0].mxu0
    %195 = vdwg.mxu0
    %v196 = vadd.f32 %v125, %v193
    %197 = vst [vmem:[#allocation7] sm:$0xff] %v196
    // Predicated region
    $region26: #{tpu_custom_call.1} parent=1 // pred_check
      %p198 = pneg %p41
    $region27: #{tpu_custom_call.1} parent=1 // pred_check_branch
      %200 = sbr.rel (%p198) target = $region29
    $region28: #{tpu_custom_call.1} parent=1 // pred_region
      %v201 = vld [vmem:[#allocation7] sm:$0xff]
      %v202 = vld [vmem:[%s2] sm:$0x1]
      %v204 = vlaneseq
      %v205 = vshrl.u32 %v204, 7
      %v206 = vsub.s32 0, %v205
      %v207 = vrot.slane %v202, %v206
      %v209 = vmul.f32 %v201, %v207
      %210 = vst [vmem:[#allocation7] sm:$0xff] %v209
    $region29: #{tpu_custom_call.1} parent=1 // pred_fallthru
      _
    // Predicated region
    $region30: #{tpu_custom_call.1} parent=1 // pred_check
      _
    $region31: #{tpu_custom_call.1} parent=1 // pred_check_branch
      %212 = sbr.rel (0) target = $region33
    $region32: #{tpu_custom_call.1} parent=1 // pred_region
      %s214 = ssub.s32 128, 128
      %215 = vsyncadd [#allocation4], %s214
      %s217 = sshll.u32 [#allocation7], 4
      %s218 = int_to_ptr.vmem [resolvable:$true] %s217
      %220 = dma.vmem_to_hbm [thread:$0]  %s218, 128, %s3, [#allocation4]
    $region33: #{tpu_custom_call.1} parent=1 // pred_fallthru
      _
    // Predicated region
    $region34: #{tpu_custom_call.1} parent=1 // pred_check
      _
    $region35: #{tpu_custom_call.1} parent=1 // pred_check_branch
      %222 = sbr.rel (0) target = $region37
    $region36: #{tpu_custom_call.1} parent=1 // pred_region
      %223 = dma.done [#allocation4], 128
    $region37: #{tpu_custom_call.1} parent=1 // pred_fallthru
      _
    %224 = vsyncpa [#allocation3], 1
    %225 = vsyncpa [#allocation6], 1
    %226 = vsyncpa [#allocation4], 1

</llo_original>
